<compile_context>
chip_gen: v7x
topology: tpu7x:2x2x1
jax: 0.10.0
libtpu: 0.0.40
codegen_flags: <defaults>
</compile_context>

<pallas_src>
import numpy as np
import jax
import jax.numpy as jnp
from jax import lax
from jax.experimental import pallas as pl
from jax.experimental.pallas import tpu as pltpu


def _largest_divisor_leq(n, k):
    for d in range(min(n, k), 0, -1):
        if n % d == 0:
            return d
    return 1


def _make_mi_hist_kernel(preterm, minval, maxval, bin_step, num_bins,
                         v_per_chunk, compute_dtype, matmul_dtype):
    # All closed-over values are Python scalars -> jaxpr literals, not captured
    # jnp constants (which Mosaic rejects).
    sqrt_pre = float(np.sqrt(preterm))
    minval = float(minval)
    maxval = float(maxval)
    bin_step = float(bin_step)

    def kernel(yt_ref, yp_ref, pab_ref):
        c = pl.program_id(2)

        # Revisited-output accumulator: the output block index depends only on
        # (batch, split), so it stays resident in VMEM across the chunk axis.
        @pl.when(c == 0)
        def _init():
            pab_ref[...] = jnp.zeros_like(pab_ref)

        # (1, 1, rows, 128) tile -> lane-major (1, V) voxel vector; downstream
        # (num_bins, V) Parzen windows are then fully lane-dense.
        yt = jnp.clip(yt_ref[...].astype(jnp.float32), 0.0, maxval
                      ).reshape(1, v_per_chunk)
        yp = jnp.clip(yp_ref[...].astype(jnp.float32), 0.0, maxval
                      ).reshape(1, v_per_chunk)

        # Fold sqrt(preterm) into the tiny (1,V) / (nb,1) operands so the exp
        # argument is just -(d*d): saves one (num_bins, V) VPU multiply each.
        bin_col = (minval + bin_step *
                   lax.broadcasted_iota(jnp.int32, (num_bins, 1), 0
                                        ).astype(jnp.float32))
        bin_col_s = (bin_col * sqrt_pre).astype(compute_dtype)
        yt_s = (yt * sqrt_pre).astype(compute_dtype)
        yp_s = (yp * sqrt_pre).astype(compute_dtype)

        da = yt_s - bin_col_s                          # (nb, V)
        db = yp_s - bin_col_s                          # (nb, V)
        w_a = jnp.exp(-(da * da))                      # (nb, V), EUP
        w_b = jnp.exp(-(db * db))                      # (nb, V), EUP

        # Single-operand normalization: scale only w_a by 1/(Da*Db).  The
        # marginals-from-joint identity (pa = sum_j pab, pb = sum_i pab) still
        # holds exactly; saves one (nb, V) multiply + one reciprocal per chunk.
        denom = (jnp.sum(w_a, axis=0, keepdims=True) *
                 jnp.sum(w_b, axis=0, keepdims=True)).astype(jnp.float32)
        inv = pl.reciprocal(denom, approx=True)        # (1, V), EUP vrcp
        i_a = w_a.astype(jnp.float32) * inv            # (nb, V)

        # Joint-histogram partial: long-V contraction on the MXU with bf16
        # operands + f32 accumulation (single MXU pass; HIGHEST/f32 would be
        # decomposed into several passes).  (M,K)x(N,K) orientation; Mosaic may
        # insert a small vxpose on the RHS, cheap relative to the exp work.
        pab_ref[...] += lax.dot_general(
            i_a.astype(matmul_dtype), w_b.astype(matmul_dtype),
            dimension_numbers=(((1,), (1,)), ((), ())),
            preferred_element_type=jnp.float32)

    return kernel


def mutual_information_pallas(y_true, y_pred, sigma_ratio=1.0, minval=0.0,
                              maxval=1.0, num_bins=32,
                              compute_dtype=jnp.float32,
                              matmul_dtype=jnp.bfloat16,
                              max_rows_per_chunk=128,
                              num_core_splits=2):
    """Returns -MI(y_true, y_pred), matching MutualInformation.forward.

    compute_dtype: dtype of the Gaussian soft-binning math (exp/square/norm).
      float32 is correct everywhere; jnp.bfloat16 gives ~1.5-2x on the binning
      phase on v6e/v7x (keep float32 on v5e: no bf16 vector/EUP datapath).
    matmul_dtype: operand dtype of the joint-histogram MXU contraction
      (accumulation is always f32).  bfloat16 = single MXU pass (recommended
      on all generations); use float32 only if bit-exact pab is required.
    max_rows_per_chunk: voxel block size in rows of 128 lanes.  Keep <=128:
      per-step pipeline overhead is already <5% there and larger tiles only
      grow the live (num_bins, V) intermediates (VMEM pressure on v7x, 64 MiB).
    num_core_splits: extra "parallel" split of the chunk axis so v7x's two
      TensorCores both get work when B is small; harmless (serial) on v5e/v6e.
    """
    B = y_true.shape[0]
    N = int(np.prod(y_true.shape[1:]))
    # TODO(synk): pad the flattened voxel count to a multiple of 128 to support
    # arbitrary spatial sizes; asserted here instead.
    assert N % 128 == 0, "voxel count per batch must be a multiple of 128"
    rows_total = N // 128

    rows = _largest_divisor_leq(rows_total, max_rows_per_chunk)
    n_chunks = rows_total // rows
    n_splits = _largest_divisor_leq(n_chunks, max(1, num_core_splits))
    chunks_per_split = n_chunks // n_splits
    v_per_chunk = rows * 128

    bin_centers = np.linspace(minval, maxval, num=num_bins)
    sigma = np.mean(np.diff(bin_centers)) * sigma_ratio
    preterm = 1.0 / (2.0 * sigma ** 2)
    bin_step = (maxval - minval) / (num_bins - 1)

    # No dtype upcast here: the kernel casts after load, so bf16/f16 inputs
    # don't get a full-volume f32 copy in HBM.
    yt = jnp.reshape(y_true, (B, n_chunks, rows, 128))
    yp = jnp.reshape(y_pred, (B, n_chunks, rows, 128))

    kernel = _make_mi_hist_kernel(preterm, minval, maxval, bin_step, num_bins,
                                  v_per_chunk, compute_dtype, matmul_dtype)

    in_map = lambda b, s, c: (b, s * chunks_per_split + c, 0, 0)
    pab_counts = pl.pallas_call(
        kernel,
        out_shape=jax.ShapeDtypeStruct((B, n_splits, num_bins, num_bins),
                                       jnp.float32),
        grid_spec=pltpu.PrefetchScalarGridSpec(
            num_scalar_prefetch=0,
            grid=(B, n_splits, chunks_per_split),
            in_specs=[
                pl.BlockSpec((1, 1, rows, 128), in_map),
                pl.BlockSpec((1, 1, rows, 128), in_map),
            ],
            out_specs=pl.BlockSpec((None, None, num_bins, num_bins),
                                   lambda b, s, c: (b, s, 0, 0)),
        ),
        compiler_params=pltpu.CompilerParams(
            dimension_semantics=("parallel", "parallel", "arbitrary"),
            vmem_limit_bytes=32 * 1024 * 1024,
        ),
    )(yt, yp)

    # Tiny (32x32) finalize in JAX: combine per-split partial histograms,
    # derive marginals from the joint, and compute MI.
    pab = jnp.sum(pab_counts, axis=1) / float(N)          # (B, nb, nb)
    pa = jnp.sum(pab, axis=2, keepdims=True)              # (B, nb, 1)
    pb = jnp.sum(pab, axis=1, keepdims=True)              # (B, 1, nb)
    papb = pa * pb + 1e-6
    mi = jnp.sum(pab * jnp.log(pab / papb + 1e-6), axis=(1, 2))
    return -jnp.mean(mi)


def mutual_information_ref(y_true, y_pred, sigma_ratio=1.0, minval=0.0,
                           maxval=1.0, num_bins=32):
    """Pure-JAX reference mirroring the PyTorch module (for verification)."""
    bin_centers = np.linspace(minval, maxval, num=num_bins)
    sigma = np.mean(np.diff(bin_centers)) * sigma_ratio
    preterm = 1.0 / (2.0 * sigma ** 2)

    B = y_true.shape[0]
    yt = jnp.clip(y_true, 0.0, maxval).reshape(B, -1, 1).astype(jnp.float32)
    yp = jnp.clip(y_pred, 0.0, maxval).reshape(B, -1, 1).astype(jnp.float32)
    nb_voxels = yt.shape[1]
    vbc = jnp.asarray(bin_centers, jnp.float32).reshape(1, 1, num_bins)

    i_a = jnp.exp(-preterm * jnp.square(yt - vbc))
    i_a = i_a / jnp.sum(i_a, axis=-1, keepdims=True)
    i_b = jnp.exp(-preterm * jnp.square(yp - vbc))
    i_b = i_b / jnp.sum(i_b, axis=-1, keepdims=True)

    pab = jnp.einsum("bvi,bvj->bij", i_a, i_b,
                     precision=lax.Precision.HIGHEST) / nb_voxels
    pa = jnp.mean(i_a, axis=1, keepdims=True)
    pb = jnp.mean(i_b, axis=1, keepdims=True)
    papb = jnp.einsum("bvi,bvj->bij", pa, pb,
                      precision=lax.Precision.HIGHEST) + 1e-6
    mi = jnp.sum(pab * jnp.log(pab / papb + 1e-6), axis=(1, 2))
    return -jnp.mean(mi)


if __name__ == "__main__":
    # layout: NCHW input [B=2, C=4, H=16, W=16] -> N = 1024 voxels per batch.
    key = jax.random.PRNGKey(0)
    k1, k2 = jax.random.split(key)
    y_true = jax.random.uniform(k1, (2, 4, 16, 16), dtype=jnp.float32)
    y_pred = jax.random.uniform(k2, (2, 4, 16, 16), dtype=jnp.float32)

    out = jax.block_until_ready(mutual_information_pallas(y_true, y_pred))
    ref = jax.block_until_ready(mutual_information_ref(y_true, y_pred))
    np.testing.assert_allclose(np.asarray(out), np.asarray(ref),
                               rtol=2e-3, atol=2e-3)
    print("KERNEL_OK")
</pallas_src>

<mosaic_0001>
module attributes {stable_mosaic.version = 11 : i64} {
  func.func @kernel(%arg0: i32, %arg1: i32, %arg2: i32, %arg3: memref<1x1x8x128xf32, #tpu.memory_space<vmem>>, %arg4: memref<1x1x8x128xf32, #tpu.memory_space<vmem>>, %arg5: memref<1x1x32x32xf32, #tpu.memory_space<vmem>>) attributes {dimension_semantics = [#tpu.dimension_semantics<parallel>, #tpu.dimension_semantics<parallel>, #tpu.dimension_semantics<arbitrary>], iteration_bounds = array<i64: 2, 1, 1>, scalar_prefetch = 0 : i64, scratch_operands = 0 : i64, tpu.core_type = #tpu.core_type<tc>, window_params = [{transform_indices = @transform_0, window_bounds = array<i64: 1, 1, 8, 128>}, {transform_indices = @transform_1, window_bounds = array<i64: 1, 1, 8, 128>}, {transform_indices = @transform_2, window_bounds = array<i64: 1, 1, 32, 32>}]} {
    %c0_i32 = arith.constant 0 : i32
    %0 = arith.cmpi eq, %arg2, %c0_i32 : i32
    %1 = arith.extui %0 : i1 to i32
    %c0_i32_0 = arith.constant 0 : i32
    %2 = arith.cmpi ne, %1, %c0_i32_0 : i32
    scf.if %2 {
      %cst_29 = arith.constant 0.000000e+00 : f32
      %58 = vector.broadcast %cst_29 : f32 to vector<32x32xf32>
      %c0_30 = arith.constant 0 : index
      %c0_31 = arith.constant 0 : index
      %c0_32 = arith.constant 0 : index
      %c0_33 = arith.constant 0 : index
      %59 = vector.load %arg5[%c0_30, %c0_31, %c0_32, %c0_33] : memref<1x1x32x32xf32, #tpu.memory_space<vmem>>, vector<1x1x32x32xf32>
      %60 = vector.shape_cast %59 : vector<1x1x32x32xf32> to vector<32x32xf32>
      %61 = vector.shape_cast %58 : vector<32x32xf32> to vector<1x1x32x32xf32>
      tpu.vector_store %arg5[%c0_30, %c0_31, %c0_32, %c0_33], %61 {strides = array<i32>} : memref<1x1x32x32xf32, #tpu.memory_space<vmem>>, vector<1x1x32x32xf32>,
    } else {
    }
    %c0 = arith.constant 0 : index
    %c0_1 = arith.constant 0 : index
    %c0_2 = arith.constant 0 : index
    %c0_3 = arith.constant 0 : index
    %3 = vector.load %arg3[%c0, %c0_1, %c0_2, %c0_3] : memref<1x1x8x128xf32, #tpu.memory_space<vmem>>, vector<1x1x8x128xf32>
    %cst = arith.constant 0.000000e+00 : f32
    %cst_4 = arith.constant 1.000000e+00 : f32
    %4 = vector.broadcast %cst : f32 to vector<1x1x8x128xf32>
    %5 = arith.maximumf %4, %3 : vector<1x1x8x128xf32>
    %6 = vector.broadcast %cst_4 : f32 to vector<1x1x8x128xf32>
    %7 = arith.minimumf %6, %5 : vector<1x1x8x128xf32>
    %8 = vector.shape_cast %7 : vector<1x1x8x128xf32> to vector<1x1024xf32>
    %c0_5 = arith.constant 0 : index
    %c0_6 = arith.constant 0 : index
    %c0_7 = arith.constant 0 : index
    %c0_8 = arith.constant 0 : index
    %9 = vector.load %arg4[%c0_5, %c0_6, %c0_7, %c0_8] : memref<1x1x8x128xf32, #tpu.memory_space<vmem>>, vector<1x1x8x128xf32>
    %cst_9 = arith.constant 0.000000e+00 : f32
    %cst_10 = arith.constant 1.000000e+00 : f32
    %10 = vector.broadcast %cst_9 : f32 to vector<1x1x8x128xf32>
    %11 = arith.maximumf %10, %9 : vector<1x1x8x128xf32>
    %12 = vector.broadcast %cst_10 : f32 to vector<1x1x8x128xf32>
    %13 = arith.minimumf %12, %11 : vector<1x1x8x128xf32>
    %14 = vector.shape_cast %13 : vector<1x1x8x128xf32> to vector<1x1024xf32>
    %15 = tpu.iota {dimensions = array<i32: 0>} : vector<32x1xi32>
    %16 = arith.sitofp %15 : vector<32x1xi32> to vector<32x1xf32>
    %cst_11 = arith.constant 0.0322580636 : f32
    %17 = vector.broadcast %cst_11 : f32 to vector<32x1xf32>
    %18 = arith.mulf %17, %16 : vector<32x1xf32>
    %cst_12 = arith.constant 0.000000e+00 : f32
    %19 = vector.broadcast %cst_12 : f32 to vector<32x1xf32>
    %20 = arith.addf %19, %18 : vector<32x1xf32>
    %cst_13 = arith.constant 21.920311 : f32
    %21 = vector.broadcast %cst_13 : f32 to vector<32x1xf32>
    %22 = arith.mulf %20, %21 : vector<32x1xf32>
    %cst_14 = arith.constant 21.920311 : f32
    %23 = vector.broadcast %cst_14 : f32 to vector<1x1024xf32>
    %24 = arith.mulf %8, %23 : vector<1x1024xf32>
    %cst_15 = arith.constant 21.920311 : f32
    %25 = vector.broadcast %cst_15 : f32 to vector<1x1024xf32>
    %26 = arith.mulf %14, %25 : vector<1x1024xf32>
    %27 = vector.broadcast %24 : vector<1x1024xf32> to vector<32x1024xf32>
    %28 = vector.broadcast %22 : vector<32x1xf32> to vector<32x1024xf32>
    %29 = arith.subf %27, %28 : vector<32x1024xf32>
    %30 = vector.broadcast %26 : vector<1x1024xf32> to vector<32x1024xf32>
    %31 = vector.broadcast %22 : vector<32x1xf32> to vector<32x1024xf32>
    %32 = arith.subf %30, %31 : vector<32x1024xf32>
    %33 = arith.mulf %29, %29 : vector<32x1024xf32>
    %cst_16 = arith.constant 0.000000e+00 : f32
    %34 = vector.broadcast %cst_16 : f32 to vector<32x1024xf32>
    %35 = arith.subf %34, %33 : vector<32x1024xf32>
    %36 = math.exp %35 : vector<32x1024xf32>
    %37 = arith.mulf %32, %32 : vector<32x1024xf32>
    %cst_17 = arith.constant 0.000000e+00 : f32
    %38 = vector.broadcast %cst_17 : f32 to vector<32x1024xf32>
    %39 = arith.subf %38, %37 : vector<32x1024xf32>
    %40 = math.exp %39 : vector<32x1024xf32>
    %cst_18 = arith.constant dense<0.000000e+00> : vector<1024xf32>
    %41 = vector.multi_reduction <add>, %36, %cst_18 [0] : vector<32x1024xf32> to vector<1024xf32>
    %42 = vector.shape_cast %41 : vector<1024xf32> to vector<1x1024xf32>
    %cst_19 = arith.constant dense<0.000000e+00> : vector<1024xf32>
    %43 = vector.multi_reduction <add>, %40, %cst_19 [0] : vector<32x1024xf32> to vector<1024xf32>
    %44 = vector.shape_cast %43 : vector<1024xf32> to vector<1x1024xf32>
    %45 = arith.mulf %42, %44 : vector<1x1024xf32>
    %46 = tpu.reciprocal %45 {approx = true} : vector<1x1024xf32> -> vector<1x1024xf32>
    %47 = vector.broadcast %46 : vector<1x1024xf32> to vector<32x1024xf32>
    %48 = arith.mulf %36, %47 : vector<32x1024xf32>
    %c0_20 = arith.constant 0 : index
    %c0_21 = arith.constant 0 : index
    %c0_22 = arith.constant 0 : index
    %c0_23 = arith.constant 0 : index
    %49 = vector.load %arg5[%c0_20, %c0_21, %c0_22, %c0_23] : memref<1x1x32x32xf32, #tpu.memory_space<vmem>>, vector<1x1x32x32xf32>
    %50 = vector.shape_cast %49 : vector<1x1x32x32xf32> to vector<32x32xf32>
    %51 = arith.truncf %48 : vector<32x1024xf32> to vector<32x1024xbf16>
    %52 = arith.truncf %40 : vector<32x1024xf32> to vector<32x1024xbf16>
    %cst_24 = arith.constant dense<0.000000e+00> : vector<32x32xf32>
    %53 = tpu.matmul %51, %52, %cst_24 {dimension_numbers = #tpu.dot_dimension_numbers<[1], [1], [0], [0], [0, 0, 1, 0], [], []>} : vector<32x1024xbf16>, vector<32x1024xbf16>, vector<32x32xf32> -> vector<32x32xf32>
    %54 = arith.addf %50, %53 : vector<32x32xf32>
    %c0_25 = arith.constant 0 : index
    %c0_26 = arith.constant 0 : index
    %c0_27 = arith.constant 0 : index
    %c0_28 = arith.constant 0 : index
    %55 = vector.load %arg5[%c0_25, %c0_26, %c0_27, %c0_28] : memref<1x1x32x32xf32, #tpu.memory_space<vmem>>, vector<1x1x32x32xf32>
    %56 = vector.shape_cast %55 : vector<1x1x32x32xf32> to vector<32x32xf32>
    %57 = vector.shape_cast %54 : vector<32x32xf32> to vector<1x1x32x32xf32>
    tpu.vector_store %arg5[%c0_25, %c0_26, %c0_27, %c0_28], %57 {strides = array<i32>} : memref<1x1x32x32xf32, #tpu.memory_space<vmem>>, vector<1x1x32x32xf32>,
    return
  }
  func.func @transform_0(%arg0: i32, %arg1: i32, %arg2: i32) -> (i32, i32, i32, i32) {
    %c1_i32 = arith.constant 1 : i32
    %0 = arith.muli %arg1, %c1_i32 : i32
    %1 = arith.addi %0, %arg2 : i32
    %c0_i32 = arith.constant 0 : i32
    %c0_i32_0 = arith.constant 0 : i32
    %c0_i32_1 = arith.constant 0 : i32
    return %arg0, %1, %c0_i32, %c0_i32_0 : i32, i32, i32, i32
  }
  func.func @transform_1(%arg0: i32, %arg1: i32, %arg2: i32) -> (i32, i32, i32, i32) {
    %c1_i32 = arith.constant 1 : i32
    %0 = arith.muli %arg1, %c1_i32 : i32
    %1 = arith.addi %0, %arg2 : i32
    %c0_i32 = arith.constant 0 : i32
    %c0_i32_0 = arith.constant 0 : i32
    %c0_i32_1 = arith.constant 0 : i32
    return %arg0, %1, %c0_i32, %c0_i32_0 : i32, i32, i32, i32
  }
  func.func @transform_2(%arg0: i32, %arg1: i32, %arg2: i32) -> (i32, i32, i32, i32) {
    %c0_i32 = arith.constant 0 : i32
    %c0_i32_0 = arith.constant 0 : i32
    %c0_i32_1 = arith.constant 0 : i32
    return %arg0, %arg1, %c0_i32, %c0_i32_0 : i32, i32, i32, i32
  }
}

</mosaic_0001>

<llo_original>
// kernel: tpu_custom_call.1
$region0: #{tpu_custom_call.1}
  #allocation0 [shape = 'u32[]', space=smem, size = 0x4, offset = 0x4, fixed_abs, tag = 'smem constant byte address 0x4 - core index']
  #allocation1 [shape = 'u32[144,128]{1,0:T(1,128)}', space=vmem, size = 0x12000, scoped, tag = 'internal scratch']
  %s0 = inlined_call_operand.hbm [shape: f32[2,1,8,128], index: 0, kind: input, shape index: {}]
  %s1 = inlined_call_operand.hbm [shape: f32[2,1,8,128], index: 1, kind: input, shape index: {}]
  %s2 = inlined_call_operand.hbm [shape: f32[2,1,32,32], index: 2, kind: output, shape index: {}]
  %s3 = sld [smem:[#allocation0]]
  $region53: #{tpu_custom_call.1} parent=0
    _
  %s5 = ssub.s32 1, %s3
  %s6 = scalar_select 0, %s5, %s3
  $region1: #{tpu_custom_call.1} parent=0
    #allocation2 [shape = 'u8[8192]{0}', space=vmem, size = 0x2000, scoped, tag = 'input window, operand 0']
    #allocation3 [shape = 's32[2]{0}', space=sflag, size = 0x8, scoped, tag = 'scoped memory for tpu_custom_call.1']
    #allocation4 [shape = 's32[2]{0}', space=sflag, size = 0x8, scoped, tag = 'scoped memory for tpu_custom_call.1']
    #allocation5 [shape = 'u8[8192]{0}', space=vmem, size = 0x2000, scoped, tag = 'input window, operand 1']
    #allocation6 [shape = 's32[2]{0}', space=sflag, size = 0x8, scoped, tag = 'scoped memory for tpu_custom_call.1']
    #allocation7 [shape = 'u8[32768]{0}', space=vmem, size = 0x8000, scoped, tag = 'output window, operand 0']
    %7 = vsyncpa [#allocation3], 0
    %s8 = scalar_lea.sflag [#allocation3], 1
    %9 = vsyncpa %s8, 0
    %10 = vsyncpa [#allocation6], 0
    %s11 = scalar_lea.sflag [#allocation6], 1
    %12 = vsyncpa %s11, 0
    %13 = vsyncpa [#allocation4], 0
    %s14 = scalar_lea.sflag [#allocation4], 1
    %15 = vsyncpa %s14, 0
    loop: start=0, step=1, limit=4
    $region2: #{tpu_custom_call.1} parent=1 // loop_pre_header
      _
    $region3: #{tpu_custom_call.1} parent=1 // loop_header
      %s17 = sphi 0, %s21
      %p18 = scmp.ge.s32.totalorder %s17, 4
      %s24 = sphi 0, %s43
      %s25 = sphi 0, %s39
      %s26 = sphi 0, %s35
      %s27 = sphi 0, %s24
      %s28 = sphi 0, %s25
      %s29 = sphi 0, %s26
      %s30 = sphi 0, %s27
      %s31 = sphi 0, %s28
      %s32 = sphi 0, %s29
      %s50 = sphi 0, %s52
      %s53 = sphi 0, %s50
      %s54 = sphi 0, %s53
      %s70 = sphi 0, %s54
      %s80 = sphi 0, %s82
      %s83 = sphi 0, %s80
      %s84 = sphi 0, %s83
      %s100 = sphi 0, %s84
      %s108 = sphi 0, %s110
      %s111 = sphi 0, %s108
      %s112 = sphi 0, %s111
      %s128 = sphi 0, %s112
    $region4: #{tpu_custom_call.1} parent=1 // loop_header_branch
      %20 = sbr.rel (%p18) target = $region8
    $region5: #{tpu_custom_call.1} parent=1 // loop_body
      %s22 = ssub.s32 %s17, 1
      %s23 = ssub.s32 %s17, 2
      %s33 = sadd.s32 1, %s26
      %p34 = scmp.ge.s32.totalorder %s33, 1
      %s35 = scalar_select %p34, 0, %s33
      %s36 = sadd.s32 1, %s25
      %s37 = scalar_select %p34, %s36, %s25
      %p38 = scmp.ge.s32.totalorder %s37, 1
      %s39 = scalar_select %p38, 0, %s37
      %s40 = sadd.s32 1, %s24
      %s41 = scalar_select %p38, %s40, %s24
      %p42 = scmp.ge.s32.totalorder %s41, 2
      %s43 = scalar_select %p42, 0, %s41
      %s44 = sadd.s32 %s25, %s26
      %s45 = sadd.s32 %s39, %s35
      %s46 = ssub.s32 %s24, %s43
      %s47 = ssub.s32 %s44, %s45
      %s48 = sor.u32 %s46, %s47
      %p49 = scmp.eq.s32.totalorder %s48, 0
      %s51 = sadd.s32 %s50, 1
      %s52 = scalar_select %p49, %s50, %s51
      %p55 = pneg %p49
      %p56 = scmp.eq.s32.totalorder %s17, 1
      %p57 = por %p55, %p56
      %p58 = scmp.ne.s32.totalorder %s50, %s53
      %p59 = scmp.eq.s32.totalorder %s17, 0
      %p60 = por %p58, %p59
      %p61 = scmp.ne.s32.totalorder %s50, %s53
      %p62 = scmp.eq.s32.totalorder %s22, 1
      %p63 = por %p61, %p62
      %p64 = scmp.ne.s32.totalorder %s53, %s54
      %p65 = scmp.eq.s32.totalorder %s22, 0
      %p66 = por %p64, %p65
      %p67 = scmp.ne.s32.totalorder %s53, %s54
      %p68 = scmp.eq.s32.totalorder %s23, 1
      %p69 = por %p67, %p68
      %p71 = scmp.ne.s32.totalorder %s54, %s70
      %p72 = scmp.eq.s32.totalorder %s23, 0
      %p73 = por %p71, %p72
      %s74 = sadd.s32 %s25, %s26
      %s75 = sadd.s32 %s39, %s35
      %s76 = ssub.s32 %s24, %s43
      %s77 = ssub.s32 %s74, %s75
      %s78 = sor.u32 %s76, %s77
      %p79 = scmp.eq.s32.totalorder %s78, 0
      %s81 = sadd.s32 %s80, 1
      %s82 = scalar_select %p79, %s80, %s81
      %p85 = pneg %p79
      %p86 = scmp.eq.s32.totalorder %s17, 1
      %p87 = por %p85, %p86
      %p88 = scmp.ne.s32.totalorder %s80, %s83
      %p89 = scmp.eq.s32.totalorder %s17, 0
      %p90 = por %p88, %p89
      %p91 = scmp.ne.s32.totalorder %s80, %s83
      %p92 = scmp.eq.s32.totalorder %s22, 1
      %p93 = por %p91, %p92
      %p94 = scmp.ne.s32.totalorder %s83, %s84
      %p95 = scmp.eq.s32.totalorder %s22, 0
      %p96 = por %p94, %p95
      %p97 = scmp.ne.s32.totalorder %s83, %s84
      %p98 = scmp.eq.s32.totalorder %s23, 1
      %p99 = por %p97, %p98
      %p101 = scmp.ne.s32.totalorder %s84, %s100
      %p102 = scmp.eq.s32.totalorder %s23, 0
      %p103 = por %p101, %p102
      %s104 = ssub.s32 %s24, %s43
      %s105 = ssub.s32 %s25, %s39
      %s106 = sor.u32 %s104, %s105
      %p107 = scmp.eq.s32.totalorder %s106, 0
      %s109 = sadd.s32 %s108, 1
      %s110 = scalar_select %p107, %s108, %s109
      %p113 = pneg %p107
      %p114 = scmp.eq.s32.totalorder %s17, 1
      %p115 = por %p113, %p114
      %p116 = scmp.ne.s32.totalorder %s108, %s111
      %p117 = scmp.eq.s32.totalorder %s17, 0
      %p118 = por %p116, %p117
      %p119 = scmp.ne.s32.totalorder %s108, %s111
      %p120 = scmp.eq.s32.totalorder %s22, 1
      %p121 = por %p119, %p120
      %p122 = scmp.ne.s32.totalorder %s111, %s112
      %p123 = scmp.eq.s32.totalorder %s22, 0
      %p124 = por %p122, %p123
      %p125 = scmp.ne.s32.totalorder %s111, %s112
      %p126 = scmp.eq.s32.totalorder %s23, 1
      %p127 = por %p125, %p126
      %p129 = scmp.ne.s32.totalorder %s112, %s128
      %p130 = scmp.eq.s32.totalorder %s23, 0
      %p131 = por %p129, %p130
      %p132 = scmp.le.s32.totalorder 1, %s17
      %p133 = scmp.lt.s32.totalorder %s17, 3
      %p134 = pnand %p132, %p133
      %p135 = pneg %p134
      // Predicated region
      $region9: #{tpu_custom_call.1} parent=5 // pred_check
        _
      $region10: #{tpu_custom_call.1} parent=5 // pred_check_branch
        %137 = sbr.rel (%p134) target = $region12
      $region11: #{tpu_custom_call.1} parent=5 // pred_region
        %s138 = ssub.s32 %s17, 1
      $region12: #{tpu_custom_call.1} parent=5 // pred_fallthru
        _
      %p139 = scmp.lt.s32.totalorder %s17, 2
      // Predicated region
      $region13: #{tpu_custom_call.1} parent=5 // pred_check
        %p140 = pneg %p139
      $region14: #{tpu_custom_call.1} parent=5 // pred_check_branch
        %142 = sbr.rel (%p140) target = $region16
      $region15: #{tpu_custom_call.1} parent=5 // pred_region
        // Predicated region
        $region17: #{tpu_custom_call.1} parent=15 // pred_check
          %p143 = pneg %p60
        $region18: #{tpu_custom_call.1} parent=15 // pred_check_branch
          %145 = sbr.rel (%p143) target = $region20
        $region19: #{tpu_custom_call.1} parent=15 // pred_region
          %s146 = sand.u32 %s50, 1
          %s147 = scalar_lea.sflag [#allocation3], %s146
          %s148 = sand.u32 %s50, 1
          %s149 = smul.addr %s148, 8
          %s150 = scalar_lea.vmem [#allocation2], %s149
          %s151 = sadd.s32 %s25, %s26
          %s153 = ssub.s32 128, 128
          %154 = vsyncadd %s147, %s153
          %s155 = sadd.s32 %s151, %s24
          %s156 = smul.addr %s155, 128
          %s157 = scalar_lea.hbm %s0, %s156
          %s159 = sshll.u32 %s150, 4
          %s160 = int_to_ptr.vmem [resolvable:$true] %s159
          %162 = dma.hbm_to_vmem [thread:$0]  %s157, 128, %s160, %s147
        $region20: #{tpu_custom_call.1} parent=15 // pred_fallthru
          _
        // Predicated region
        $region21: #{tpu_custom_call.1} parent=15 // pred_check
          %p163 = pneg %p90
        $region22: #{tpu_custom_call.1} parent=15 // pred_check_branch
          %165 = sbr.rel (%p163) target = $region24
        $region23: #{tpu_custom_call.1} parent=15 // pred_region
          %s166 = sand.u32 %s80, 1
          %s167 = scalar_lea.sflag [#allocation6], %s166
          %s168 = sand.u32 %s80, 1
          %s169 = smul.addr %s168, 8
          %s170 = scalar_lea.vmem [#allocation5], %s169
          %s171 = sadd.s32 %s25, %s26
          %s173 = ssub.s32 128, 128
          %174 = vsyncadd %s167, %s173
          %s175 = sadd.s32 %s171, %s24
          %s176 = smul.addr %s175, 128
          %s177 = scalar_lea.hbm %s1, %s176
          %s179 = sshll.u32 %s170, 4
          %s180 = int_to_ptr.vmem [resolvable:$true] %s179
          %182 = dma.hbm_to_vmem [thread:$0]  %s177, 128, %s180, %s167
        $region24: #{tpu_custom_call.1} parent=15 // pred_fallthru
          _
      $region16: #{tpu_custom_call.1} parent=5 // pred_fallthru
        _
      %p183 = scmp.le.s32.totalorder 1, %s17
      %p184 = scmp.lt.s32.totalorder %s17, 3
      %p185 = pnand %p183, %p184
      %p186 = pneg %p185
      // Predicated region
      $region25: #{tpu_custom_call.1} parent=5 // pred_check
        _
      $region26: #{tpu_custom_call.1} parent=5 // pred_check_branch
        %188 = sbr.rel (%p185) target = $region28
      $region27: #{tpu_custom_call.1} parent=5 // pred_region
        %s189 = ssub.s32 %s17, 1
        %s190 = sand.u32 %s53, 1
        %s191 = scalar_lea.sflag [#allocation3], %s190
        %s192 = sand.u32 %s53, 1
        %s193 = smul.addr %s192, 8
        %s194 = scalar_lea.vmem [#allocation2], %s193
        // Predicated region
        $region29: #{tpu_custom_call.1} parent=27 // pred_check
          %p195 = pneg %p66
        $region30: #{tpu_custom_call.1} parent=27 // pred_check_branch
          %197 = sbr.rel (%p195) target = $region32
        $region31: #{tpu_custom_call.1} parent=27 // pred_region
          %198 = dma.done %s191, 128
        $region32: #{tpu_custom_call.1} parent=27 // pred_fallthru
          _
        %s199 = sand.u32 %s83, 1
        %s200 = scalar_lea.sflag [#allocation6], %s199
        %s201 = sand.u32 %s83, 1
        %s202 = smul.addr %s201, 8
        %s203 = scalar_lea.vmem [#allocation5], %s202
        // Predicated region
        $region33: #{tpu_custom_call.1} parent=27 // pred_check
          %p204 = pneg %p96
        $region34: #{tpu_custom_call.1} parent=27 // pred_check_branch
          %206 = sbr.rel (%p204) target = $region36
        $region35: #{tpu_custom_call.1} parent=27 // pred_region
          %207 = dma.done %s200, 128
        $region36: #{tpu_custom_call.1} parent=27 // pred_fallthru
          _
        %s208 = sand.u32 %s53, 1
        %s209 = scalar_lea.sflag [#allocation3], %s208
        %s210 = sand.u32 %s53, 1
        %s211 = smul.addr %s210, 8
        %s212 = scalar_lea.vmem [#allocation2], %s211
        %p213 = pneg %p66
        %p214 = pneg %p63
        %s215 = sand.u32 %s83, 1
        %s216 = scalar_lea.sflag [#allocation6], %s215
        %s217 = sand.u32 %s83, 1
        %s218 = smul.addr %s217, 8
        %s219 = scalar_lea.vmem [#allocation5], %s218
        %p220 = pneg %p96
        %p221 = pneg %p93
        %p222 = pneg %p124
        %p223 = pneg %p121
        %s224 = sand.u32 %s111, 1
        %s225 = scalar_lea.sflag [#allocation4], %s224
        %s226 = sand.u32 %s111, 1
        %s227 = smul.addr %s226, 32
        %s228 = scalar_lea.vmem [#allocation7], %s227
        %s229 = sadd.s32 %s28, %s29
        %s230 = sadd.s32 %s28, %s29
        %p232 = scmp.eq.s32.totalorder %s29, 0
        // Predicated region
        $region37: #{tpu_custom_call.1} parent=27 // pred_check
          %p233 = pneg %p232
        $region38: #{tpu_custom_call.1} parent=27 // pred_check_branch
          %235 = sbr.rel (%p233) target = $region40
        $region39: #{tpu_custom_call.1} parent=27 // pred_region
          %vm236 = vcmask 261120
          %237 = vst.msk [vmem:[%s228] sm:$0xff] %vm236, 0.0
          %238 = vst.msk [vmem:[%s228 + $0x8] sm:$0xff] %vm236, 0.0
          %239 = vst.msk [vmem:[%s228 + $0x10] sm:$0xff] %vm236, 0.0
          %240 = vst.msk [vmem:[%s228 + $0x18] sm:$0xff] %vm236, 0.0
        $region40: #{tpu_custom_call.1} parent=27 // pred_fallthru
          _
        %v241 = vld [vmem:[%s194] sm:$0xff]
        %v242 = vmax.f32 %v241, 0.0
        %v243 = vmin.f32 %v242, 1.0
        %v244 = vcombine.high %v243, 0.0
        %v246 = vunpack.c.l.s4 1983009808
        %v247 = vunpack.c.0.s8 %v246
        %v248 = vlaneseq
        %v249 = vshrl.u32 %v248, 7
        %v250 = vsub.s32 %v247, %v249
        %v251 = vrot.slane %v243, %v250
        %v253 = vunpack.c.l.s4 1983009808
        %v254 = vunpack.c.0.s8 %v253
        %v255 = vlaneseq
        %v256 = vshrl.u32 %v255, 7
        %v257 = vsub.s32 %v254, %v256
        %v258 = vrot.slane %v244, %v257
        %v259 = vcombine.high %v251, 0.0
        %v261 = vunpack.c.l.s4 1934713408
        %v262 = vunpack.c.0.s8 %v261
        %v263 = vlaneseq
        %v264 = vshrl.u32 %v263, 7
        %v265 = vsub.s32 %v262, %v264
        %v266 = vrot.slane %v251, %v265
        %v268 = vunpack.c.l.s4 1934713408
        %v269 = vunpack.c.0.s8 %v268
        %v270 = vlaneseq
        %v271 = vshrl.u32 %v270, 7
        %v272 = vsub.s32 %v269, %v271
        %v273 = vrot.slane %v259, %v272
        %v274 = vcombine.high %v258, 0.0
        %v276 = vunpack.c.l.s4 1934713408
        %v277 = vunpack.c.0.s8 %v276
        %v278 = vlaneseq
        %v279 = vshrl.u32 %v278, 7
        %v280 = vsub.s32 %v277, %v279
        %v281 = vrot.slane %v258, %v280
        %v283 = vunpack.c.l.s4 1934713408
        %v284 = vunpack.c.0.s8 %v283
        %v285 = vlaneseq
        %v286 = vshrl.u32 %v285, 7
        %v287 = vsub.s32 %v284, %v286
        %v288 = vrot.slane %v274, %v287
        %v289 = vcombine.high %v266, 0.0
        %v290 = vcombine.high %v273, 0.0
        %v291 = vcombine.high %v281, 0.0
        %v292 = vcombine.high %v288, 0.0
        %v293 = vld [vmem:[%s203] sm:$0xff]
        %v294 = vmax.f32 %v293, 0.0
        %v295 = vmin.f32 %v294, 1.0
        %v296 = vcombine.high %v295, 0.0
        %v298 = vunpack.c.l.s4 1983009808
        %v299 = vunpack.c.0.s8 %v298
        %v300 = vlaneseq
        %v301 = vshrl.u32 %v300, 7
        %v302 = vsub.s32 %v299, %v301
        %v303 = vrot.slane %v295, %v302
        %v305 = vunpack.c.l.s4 1983009808
        %v306 = vunpack.c.0.s8 %v305
        %v307 = vlaneseq
        %v308 = vshrl.u32 %v307, 7
        %v309 = vsub.s32 %v306, %v308
        %v310 = vrot.slane %v296, %v309
        %v311 = vcombine.high %v303, 0.0
        %v313 = vunpack.c.l.s4 1934713408
        %v314 = vunpack.c.0.s8 %v313
        %v315 = vlaneseq
        %v316 = vshrl.u32 %v315, 7
        %v317 = vsub.s32 %v314, %v316
        %v318 = vrot.slane %v303, %v317
        %v320 = vunpack.c.l.s4 1934713408
        %v321 = vunpack.c.0.s8 %v320
        %v322 = vlaneseq
        %v323 = vshrl.u32 %v322, 7
        %v324 = vsub.s32 %v321, %v323
        %v325 = vrot.slane %v311, %v324
        %v326 = vcombine.high %v310, 0.0
        %v328 = vunpack.c.l.s4 1934713408
        %v329 = vunpack.c.0.s8 %v328
        %v330 = vlaneseq
        %v331 = vshrl.u32 %v330, 7
        %v332 = vsub.s32 %v329, %v331
        %v333 = vrot.slane %v310, %v332
        %v335 = vunpack.c.l.s4 1934713408
        %v336 = vunpack.c.0.s8 %v335
        %v337 = vlaneseq
        %v338 = vshrl.u32 %v337, 7
        %v339 = vsub.s32 %v336, %v338
        %v340 = vrot.slane %v326, %v339
        %v341 = vcombine.high %v318, 0.0
        %v342 = vcombine.high %v325, 0.0
        %v343 = vcombine.high %v333, 0.0
        %v344 = vcombine.high %v340, 0.0
        %v345 = vlaneseq
        %v346 = vshrl.u32 %v345, 7
        %v347 = vadd.s32 %v346, 8
        %v348 = vadd.s32 %v346, 16
        %v349 = vadd.s32 %v346, 24
        %v350 = vcvt.s32.f32 %v346
        %v351 = vcvt.s32.f32 %v347
        %v352 = vcvt.s32.f32 %v348
        %v353 = vcvt.s32.f32 %v349
        %v354 = vmul.f32 %v350, 0.032258064
        %v355 = vmul.f32 %v351, 0.032258064
        %v356 = vmul.f32 %v352, 0.032258064
        %v357 = vmul.f32 %v353, 0.032258064
        %v358 = vadd.f32 %v354, 0.0
        %v359 = vadd.f32 %v355, 0.0
        %v360 = vadd.f32 %v356, 0.0
        %v361 = vadd.f32 %v357, 0.0
        %v362 = vmul.f32 %v358, 21.920311
        %v363 = vmul.f32 %v359, 21.920311
        %v364 = vmul.f32 %v360, 21.920311
        %v365 = vmul.f32 %v361, 21.920311
        %v366 = vmul.f32 %v266, 21.920311
        %v367 = vmul.f32 %v289, 21.920311
        %v368 = vmul.f32 %v273, 21.920311
        %v369 = vmul.f32 %v290, 21.920311
        %v370 = vmul.f32 %v281, 21.920311
        %v371 = vmul.f32 %v291, 21.920311
        %v372 = vmul.f32 %v288, 21.920311
        %v373 = vmul.f32 %v292, 21.920311
        %v374 = vmul.f32 %v318, 21.920311
        %v375 = vmul.f32 %v341, 21.920311
        %v376 = vmul.f32 %v325, 21.920311
        %v377 = vmul.f32 %v342, 21.920311
        %v378 = vmul.f32 %v333, 21.920311
        %v379 = vmul.f32 %v343, 21.920311
        %v380 = vmul.f32 %v340, 21.920311
        %v381 = vmul.f32 %v344, 21.920311
        %v382 = vlaneseq
        %v383 = vshrl.u32 %v382, 7
        %v384 = vsub.s32 0, %v383
        %v385 = vrot.slane %v366, %v384
        %v386 = vlaneseq
        %v387 = vshrl.u32 %v386, 7
        %v388 = vsub.s32 0, %v387
        %v389 = vrot.slane %v367, %v388
        %v390 = vlaneseq
        %v391 = vshrl.u32 %v390, 7
        %v392 = vsub.s32 0, %v391
        %v393 = vrot.slane %v368, %v392
        %v394 = vlaneseq
        %v395 = vshrl.u32 %v394, 7
        %v396 = vsub.s32 0, %v395
        %v397 = vrot.slane %v369, %v396
        %v398 = vlaneseq
        %v399 = vshrl.u32 %v398, 7
        %v400 = vsub.s32 0, %v399
        %v401 = vrot.slane %v370, %v400
        %v402 = vlaneseq
        %v403 = vshrl.u32 %v402, 7
        %v404 = vsub.s32 0, %v403
        %v405 = vrot.slane %v371, %v404
        %v406 = vlaneseq
        %v407 = vshrl.u32 %v406, 7
        %v408 = vsub.s32 0, %v407
        %v409 = vrot.slane %v372, %v408
        %v410 = vlaneseq
        %v411 = vshrl.u32 %v410, 7
        %v412 = vsub.s32 0, %v411
        %v413 = vrot.slane %v373, %v412
        %v414 = vsub.f32 %v385, %v362
        %v415 = vsub.f32 %v389, %v362
        %v416 = vsub.f32 %v393, %v362
        %v417 = vsub.f32 %v397, %v362
        %v418 = vsub.f32 %v401, %v362
        %v419 = vsub.f32 %v405, %v362
        %v420 = vsub.f32 %v409, %v362
        %v421 = vsub.f32 %v413, %v362
        %v422 = vsub.f32 %v385, %v363
        %v423 = vsub.f32 %v389, %v363
        %v424 = vsub.f32 %v393, %v363
        %v425 = vsub.f32 %v397, %v363
        %v426 = vsub.f32 %v401, %v363
        %v427 = vsub.f32 %v405, %v363
        %v428 = vsub.f32 %v409, %v363
        %v429 = vsub.f32 %v413, %v363
        %v430 = vsub.f32 %v385, %v364
        %v431 = vsub.f32 %v389, %v364
        %v432 = vsub.f32 %v393, %v364
        %v433 = vsub.f32 %v397, %v364
        %v434 = vsub.f32 %v401, %v364
        %v435 = vsub.f32 %v405, %v364
        %v436 = vsub.f32 %v409, %v364
        %v437 = vsub.f32 %v413, %v364
        %v438 = vsub.f32 %v385, %v365
        %v439 = vsub.f32 %v389, %v365
        %v440 = vsub.f32 %v393, %v365
        %v441 = vsub.f32 %v397, %v365
        %v442 = vsub.f32 %v401, %v365
        %v443 = vsub.f32 %v405, %v365
        %v444 = vsub.f32 %v409, %v365
        %v445 = vsub.f32 %v413, %v365
        %v446 = vlaneseq
        %v447 = vshrl.u32 %v446, 7
        %v448 = vsub.s32 0, %v447
        %v449 = vrot.slane %v374, %v448
        %v450 = vlaneseq
        %v451 = vshrl.u32 %v450, 7
        %v452 = vsub.s32 0, %v451
        %v453 = vrot.slane %v375, %v452
        %v454 = vlaneseq
        %v455 = vshrl.u32 %v454, 7
        %v456 = vsub.s32 0, %v455
        %v457 = vrot.slane %v376, %v456
        %v458 = vlaneseq
        %v459 = vshrl.u32 %v458, 7
        %v460 = vsub.s32 0, %v459
        %v461 = vrot.slane %v377, %v460
        %v462 = vlaneseq
        %v463 = vshrl.u32 %v462, 7
        %v464 = vsub.s32 0, %v463
        %v465 = vrot.slane %v378, %v464
        %v466 = vlaneseq
        %v467 = vshrl.u32 %v466, 7
        %v468 = vsub.s32 0, %v467
        %v469 = vrot.slane %v379, %v468
        %v470 = vlaneseq
        %v471 = vshrl.u32 %v470, 7
        %v472 = vsub.s32 0, %v471
        %v473 = vrot.slane %v380, %v472
        %v474 = vlaneseq
        %v475 = vshrl.u32 %v474, 7
        %v476 = vsub.s32 0, %v475
        %v477 = vrot.slane %v381, %v476
        %v478 = vsub.f32 %v449, %v362
        %v479 = vsub.f32 %v453, %v362
        %v480 = vsub.f32 %v457, %v362
        %v481 = vsub.f32 %v461, %v362
        %v482 = vsub.f32 %v465, %v362
        %v483 = vsub.f32 %v469, %v362
        %v484 = vsub.f32 %v473, %v362
        %v485 = vsub.f32 %v477, %v362
        %v486 = vsub.f32 %v449, %v363
        %v487 = vsub.f32 %v453, %v363
        %v488 = vsub.f32 %v457, %v363
        %v489 = vsub.f32 %v461, %v363
        %v490 = vsub.f32 %v465, %v363
        %v491 = vsub.f32 %v469, %v363
        %v492 = vsub.f32 %v473, %v363
        %v493 = vsub.f32 %v477, %v363
        %v494 = vsub.f32 %v449, %v364
        %v495 = vsub.f32 %v453, %v364
        %v496 = vsub.f32 %v457, %v364
        %v497 = vsub.f32 %v461, %v364
        %v498 = vsub.f32 %v465, %v364
        %v499 = vsub.f32 %v469, %v364
        %v500 = vsub.f32 %v473, %v364
        %v501 = vsub.f32 %v477, %v364
        %v502 = vsub.f32 %v449, %v365
        %v503 = vsub.f32 %v453, %v365
        %v504 = vsub.f32 %v457, %v365
        %v505 = vsub.f32 %v461, %v365
        %v506 = vsub.f32 %v465, %v365
        %v507 = vsub.f32 %v469, %v365
        %v508 = vsub.f32 %v473, %v365
        %v509 = vsub.f32 %v477, %v365
        %v510 = vmul.f32 %v414, %v414
        %v511 = vmul.f32 %v415, %v415
        %v512 = vmul.f32 %v416, %v416
        %v513 = vmul.f32 %v417, %v417
        %v514 = vmul.f32 %v418, %v418
        %v515 = vmul.f32 %v419, %v419
        %v516 = vmul.f32 %v420, %v420
        %v517 = vmul.f32 %v421, %v421
        %v518 = vmul.f32 %v422, %v422
        %v519 = vmul.f32 %v423, %v423
        %v520 = vmul.f32 %v424, %v424
        %v521 = vmul.f32 %v425, %v425
        %v522 = vmul.f32 %v426, %v426
        %v523 = vmul.f32 %v427, %v427
        %v524 = vmul.f32 %v428, %v428
        %v525 = vmul.f32 %v429, %v429
        %v526 = vmul.f32 %v430, %v430
        %v527 = vmul.f32 %v431, %v431
        %v528 = vmul.f32 %v432, %v432
        %v529 = vmul.f32 %v433, %v433
        %v530 = vmul.f32 %v434, %v434
        %v531 = vmul.f32 %v435, %v435
        %v532 = vmul.f32 %v436, %v436
        %v533 = vmul.f32 %v437, %v437
        %v534 = vmul.f32 %v438, %v438
        %v535 = vmul.f32 %v439, %v439
        %v536 = vmul.f32 %v440, %v440
        %v537 = vmul.f32 %v441, %v441
        %v538 = vmul.f32 %v442, %v442
        %v539 = vmul.f32 %v443, %v443
        %v540 = vmul.f32 %v444, %v444
        %v541 = vmul.f32 %v445, %v445
        %v542 = vsub.f32 0.0, %v510
        %v543 = vsub.f32 0.0, %v511
        %v544 = vsub.f32 0.0, %v512
        %v545 = vsub.f32 0.0, %v513
        %v546 = vsub.f32 0.0, %v514
        %v547 = vsub.f32 0.0, %v515
        %v548 = vsub.f32 0.0, %v516
        %v549 = vsub.f32 0.0, %v517
        %v550 = vsub.f32 0.0, %v518
        %v551 = vsub.f32 0.0, %v519
        %v552 = vsub.f32 0.0, %v520
        %v553 = vsub.f32 0.0, %v521
        %v554 = vsub.f32 0.0, %v522
        %v555 = vsub.f32 0.0, %v523
        %v556 = vsub.f32 0.0, %v524
        %v557 = vsub.f32 0.0, %v525
        %v558 = vsub.f32 0.0, %v526
        %v559 = vsub.f32 0.0, %v527
        %v560 = vsub.f32 0.0, %v528
        %v561 = vsub.f32 0.0, %v529
        %v562 = vsub.f32 0.0, %v530
        %v563 = vsub.f32 0.0, %v531
        %v564 = vsub.f32 0.0, %v532
        %v565 = vsub.f32 0.0, %v533
        %v566 = vsub.f32 0.0, %v534
        %v567 = vsub.f32 0.0, %v535
        %v568 = vsub.f32 0.0, %v536
        %v569 = vsub.f32 0.0, %v537
        %v570 = vsub.f32 0.0, %v538
        %v571 = vsub.f32 0.0, %v539
        %v572 = vsub.f32 0.0, %v540
        %v573 = vsub.f32 0.0, %v541
        %v574 = vmul.f32 %v542, 1.442695
        %v575 = vpow.pop %v574
        %v576 = vmul.f32 %v543, 1.442695
        %v577 = vpow.pop %v576
        %v578 = vmul.f32 %v544, 1.442695
        %v579 = vpow.pop %v578
        %v580 = vmul.f32 %v545, 1.442695
        %v581 = vpow.pop %v580
        %v582 = vmul.f32 %v546, 1.442695
        %v583 = vpow.pop %v582
        %v584 = vmul.f32 %v547, 1.442695
        %v585 = vpow.pop %v584
        %v586 = vmul.f32 %v548, 1.442695
        %v587 = vpow.pop %v586
        %v588 = vmul.f32 %v549, 1.442695
        %v589 = vpow.pop %v588
        %v590 = vmul.f32 %v550, 1.442695
        %v591 = vpow.pop %v590
        %v592 = vmul.f32 %v551, 1.442695
        %v593 = vpow.pop %v592
        %v594 = vmul.f32 %v552, 1.442695
        %v595 = vpow.pop %v594
        %v596 = vmul.f32 %v553, 1.442695
        %v597 = vpow.pop %v596
        %v598 = vmul.f32 %v554, 1.442695
        %v599 = vpow.pop %v598
        %v600 = vmul.f32 %v555, 1.442695
        %v601 = vpow.pop %v600
        %v602 = vmul.f32 %v556, 1.442695
        %v603 = vpow.pop %v602
        %v604 = vmul.f32 %v557, 1.442695
        %v605 = vpow.pop %v604
        %v606 = vmul.f32 %v558, 1.442695
        %v607 = vpow.pop %v606
        %v608 = vmul.f32 %v559, 1.442695
        %v609 = vpow.pop %v608
        %v610 = vmul.f32 %v560, 1.442695
        %v611 = vpow.pop %v610
        %v612 = vmul.f32 %v561, 1.442695
        %v613 = vpow.pop %v612
        %v614 = vmul.f32 %v562, 1.442695
        %v615 = vpow.pop %v614
        %v616 = vmul.f32 %v563, 1.442695
        %v617 = vpow.pop %v616
        %v618 = vmul.f32 %v564, 1.442695
        %v619 = vpow.pop %v618
        %v620 = vmul.f32 %v565, 1.442695
        %v621 = vpow.pop %v620
        %v622 = vmul.f32 %v566, 1.442695
        %v623 = vpow.pop %v622
        %v624 = vmul.f32 %v567, 1.442695
        %v625 = vpow.pop %v624
        %v626 = vmul.f32 %v568, 1.442695
        %v627 = vpow.pop %v626
        %v628 = vmul.f32 %v569, 1.442695
        %v629 = vpow.pop %v628
        %v630 = vmul.f32 %v570, 1.442695
        %v631 = vpow.pop %v630
        %v632 = vmul.f32 %v571, 1.442695
        %v633 = vpow.pop %v632
        %v634 = vmul.f32 %v572, 1.442695
        %v635 = vpow.pop %v634
        %v636 = vmul.f32 %v573, 1.442695
        %v637 = vpow.pop %v636
        %v638 = vmul.f32 %v478, %v478
        %v639 = vmul.f32 %v479, %v479
        %v640 = vmul.f32 %v480, %v480
        %v641 = vmul.f32 %v481, %v481
        %v642 = vmul.f32 %v482, %v482
        %v643 = vmul.f32 %v483, %v483
        %v644 = vmul.f32 %v484, %v484
        %v645 = vmul.f32 %v485, %v485
        %v646 = vmul.f32 %v486, %v486
        %v647 = vmul.f32 %v487, %v487
        %v648 = vmul.f32 %v488, %v488
        %v649 = vmul.f32 %v489, %v489
        %v650 = vmul.f32 %v490, %v490
        %v651 = vmul.f32 %v491, %v491
        %v652 = vmul.f32 %v492, %v492
        %v653 = vmul.f32 %v493, %v493
        %v654 = vmul.f32 %v494, %v494
        %v655 = vmul.f32 %v495, %v495
        %v656 = vmul.f32 %v496, %v496
        %v657 = vmul.f32 %v497, %v497
        %v658 = vmul.f32 %v498, %v498
        %v659 = vmul.f32 %v499, %v499
        %v660 = vmul.f32 %v500, %v500
        %v661 = vmul.f32 %v501, %v501
        %v662 = vmul.f32 %v502, %v502
        %v663 = vmul.f32 %v503, %v503
        %v664 = vmul.f32 %v504, %v504
        %v665 = vmul.f32 %v505, %v505
        %v666 = vmul.f32 %v506, %v506
        %v667 = vmul.f32 %v507, %v507
        %v668 = vmul.f32 %v508, %v508
        %v669 = vmul.f32 %v509, %v509
        %v670 = vsub.f32 0.0, %v638
        %v671 = vsub.f32 0.0, %v639
        %v672 = vsub.f32 0.0, %v640
        %v673 = vsub.f32 0.0, %v641
        %v674 = vsub.f32 0.0, %v642
        %v675 = vsub.f32 0.0, %v643
        %v676 = vsub.f32 0.0, %v644
        %v677 = vsub.f32 0.0, %v645
        %v678 = vsub.f32 0.0, %v646
        %v679 = vsub.f32 0.0, %v647
        %v680 = vsub.f32 0.0, %v648
        %v681 = vsub.f32 0.0, %v649
        %v682 = vsub.f32 0.0, %v650
        %v683 = vsub.f32 0.0, %v651
        %v684 = vsub.f32 0.0, %v652
        %v685 = vsub.f32 0.0, %v653
        %v686 = vsub.f32 0.0, %v654
        %v687 = vsub.f32 0.0, %v655
        %v688 = vsub.f32 0.0, %v656
        %v689 = vsub.f32 0.0, %v657
        %v690 = vsub.f32 0.0, %v658
        %v691 = vsub.f32 0.0, %v659
        %v692 = vsub.f32 0.0, %v660
        %v693 = vsub.f32 0.0, %v661
        %v694 = vsub.f32 0.0, %v662
        %v695 = vsub.f32 0.0, %v663
        %v696 = vsub.f32 0.0, %v664
        %v697 = vsub.f32 0.0, %v665
        %v698 = vsub.f32 0.0, %v666
        %v699 = vsub.f32 0.0, %v667
        %v700 = vsub.f32 0.0, %v668
        %v701 = vsub.f32 0.0, %v669
        %v702 = vmul.f32 %v670, 1.442695
        %v703 = vpow.pop %v702
        %v704 = vmul.f32 %v671, 1.442695
        %v705 = vpow.pop %v704
        %v706 = vmul.f32 %v672, 1.442695
        %v707 = vpow.pop %v706
        %v708 = vmul.f32 %v673, 1.442695
        %v709 = vpow.pop %v708
        %v710 = vmul.f32 %v674, 1.442695
        %v711 = vpow.pop %v710
        %v712 = vmul.f32 %v675, 1.442695
        %v713 = vpow.pop %v712
        %v714 = vmul.f32 %v676, 1.442695
        %v715 = vpow.pop %v714
        %v716 = vmul.f32 %v677, 1.442695
        %v717 = vpow.pop %v716
        %v718 = vmul.f32 %v678, 1.442695
        %v719 = vpow.pop %v718
        %v720 = vmul.f32 %v679, 1.442695
        %v721 = vpow.pop %v720
        %v722 = vmul.f32 %v680, 1.442695
        %v723 = vpow.pop %v722
        %v724 = vmul.f32 %v681, 1.442695
        %v725 = vpow.pop %v724
        %v726 = vmul.f32 %v682, 1.442695
        %v727 = vpow.pop %v726
        %v728 = vmul.f32 %v683, 1.442695
        %v729 = vpow.pop %v728
        %v730 = vmul.f32 %v684, 1.442695
        %v731 = vpow.pop %v730
        %v732 = vmul.f32 %v685, 1.442695
        %v733 = vpow.pop %v732
        %v734 = vmul.f32 %v686, 1.442695
        %v735 = vpow.pop %v734
        %v736 = vmul.f32 %v687, 1.442695
        %v737 = vpow.pop %v736
        %v738 = vmul.f32 %v688, 1.442695
        %v739 = vpow.pop %v738
        %v740 = vmul.f32 %v689, 1.442695
        %v741 = vpow.pop %v740
        %v742 = vmul.f32 %v690, 1.442695
        %v743 = vpow.pop %v742
        %v744 = vmul.f32 %v691, 1.442695
        %v745 = vpow.pop %v744
        %v746 = vmul.f32 %v692, 1.442695
        %v747 = vpow.pop %v746
        %v748 = vmul.f32 %v693, 1.442695
        %v749 = vpow.pop %v748
        %v750 = vmul.f32 %v694, 1.442695
        %v751 = vpow.pop %v750
        %v752 = vmul.f32 %v695, 1.442695
        %v753 = vpow.pop %v752
        %v754 = vmul.f32 %v696, 1.442695
        %v755 = vpow.pop %v754
        %v756 = vmul.f32 %v697, 1.442695
        %v757 = vpow.pop %v756
        %v758 = vmul.f32 %v698, 1.442695
        %v759 = vpow.pop %v758
        %v760 = vmul.f32 %v699, 1.442695
        %v761 = vpow.pop %v760
        %v762 = vmul.f32 %v700, 1.442695
        %v763 = vpow.pop %v762
        %v764 = vmul.f32 %v701, 1.442695
        %v765 = vpow.pop %v764
        %v766 = vadd.f32 %v575, %v591
        %v767 = vadd.f32 %v766, %v607
        %v768 = vadd.f32 %v767, %v623
        %v769 = vrot.slane %v768, 4
        %v770 = vadd.f32 %v768, %v769
        %v771 = vrot.slane %v770, 2
        %v772 = vadd.f32 %v770, %v771
        %v773 = vrot.slane %v772, 1
        %v774 = vadd.f32 %v772, %v773
        %v775 = vadd.f32 %v577, %v593
        %v776 = vadd.f32 %v775, %v609
        %v777 = vadd.f32 %v776, %v625
        %v778 = vrot.slane %v777, 4
        %v779 = vadd.f32 %v777, %v778
        %v780 = vrot.slane %v779, 2
        %v781 = vadd.f32 %v779, %v780
        %v782 = vrot.slane %v781, 1
        %v783 = vadd.f32 %v781, %v782
        %v784 = vadd.f32 %v579, %v595
        %v785 = vadd.f32 %v784, %v611
        %v786 = vadd.f32 %v785, %v627
        %v787 = vrot.slane %v786, 4
        %v788 = vadd.f32 %v786, %v787
        %v789 = vrot.slane %v788, 2
        %v790 = vadd.f32 %v788, %v789
        %v791 = vrot.slane %v790, 1
        %v792 = vadd.f32 %v790, %v791
        %v793 = vadd.f32 %v581, %v597
        %v794 = vadd.f32 %v793, %v613
        %v795 = vadd.f32 %v794, %v629
        %v796 = vrot.slane %v795, 4
        %v797 = vadd.f32 %v795, %v796
        %v798 = vrot.slane %v797, 2
        %v799 = vadd.f32 %v797, %v798
        %v800 = vrot.slane %v799, 1
        %v801 = vadd.f32 %v799, %v800
        %v802 = vadd.f32 %v583, %v599
        %v803 = vadd.f32 %v802, %v615
        %v804 = vadd.f32 %v803, %v631
        %v805 = vrot.slane %v804, 4
        %v806 = vadd.f32 %v804, %v805
        %v807 = vrot.slane %v806, 2
        %v808 = vadd.f32 %v806, %v807
        %v809 = vrot.slane %v808, 1
        %v810 = vadd.f32 %v808, %v809
        %v811 = vadd.f32 %v585, %v601
        %v812 = vadd.f32 %v811, %v617
        %v813 = vadd.f32 %v812, %v633
        %v814 = vrot.slane %v813, 4
        %v815 = vadd.f32 %v813, %v814
        %v816 = vrot.slane %v815, 2
        %v817 = vadd.f32 %v815, %v816
        %v818 = vrot.slane %v817, 1
        %v819 = vadd.f32 %v817, %v818
        %v820 = vadd.f32 %v587, %v603
        %v821 = vadd.f32 %v820, %v619
        %v822 = vadd.f32 %v821, %v635
        %v823 = vrot.slane %v822, 4
        %v824 = vadd.f32 %v822, %v823
        %v825 = vrot.slane %v824, 2
        %v826 = vadd.f32 %v824, %v825
        %v827 = vrot.slane %v826, 1
        %v828 = vadd.f32 %v826, %v827
        %v829 = vadd.f32 %v589, %v605
        %v830 = vadd.f32 %v829, %v621
        %v831 = vadd.f32 %v830, %v637
        %v832 = vrot.slane %v831, 4
        %v833 = vadd.f32 %v831, %v832
        %v834 = vrot.slane %v833, 2
        %v835 = vadd.f32 %v833, %v834
        %v836 = vrot.slane %v835, 1
        %v837 = vadd.f32 %v835, %v836
        %v838 = vadd.f32 %v703, %v719
        %v839 = vadd.f32 %v838, %v735
        %v840 = vadd.f32 %v839, %v751
        %v841 = vrot.slane %v840, 4
        %v842 = vadd.f32 %v840, %v841
        %v843 = vrot.slane %v842, 2
        %v844 = vadd.f32 %v842, %v843
        %v845 = vrot.slane %v844, 1
        %v846 = vadd.f32 %v844, %v845
        %v847 = vadd.f32 %v705, %v721
        %v848 = vadd.f32 %v847, %v737
        %v849 = vadd.f32 %v848, %v753
        %v850 = vrot.slane %v849, 4
        %v851 = vadd.f32 %v849, %v850
        %v852 = vrot.slane %v851, 2
        %v853 = vadd.f32 %v851, %v852
        %v854 = vrot.slane %v853, 1
        %v855 = vadd.f32 %v853, %v854
        %v856 = vadd.f32 %v707, %v723
        %v857 = vadd.f32 %v856, %v739
        %v858 = vadd.f32 %v857, %v755
        %v859 = vrot.slane %v858, 4
        %v860 = vadd.f32 %v858, %v859
        %v861 = vrot.slane %v860, 2
        %v862 = vadd.f32 %v860, %v861
        %v863 = vrot.slane %v862, 1
        %v864 = vadd.f32 %v862, %v863
        %v865 = vadd.f32 %v709, %v725
        %v866 = vadd.f32 %v865, %v741
        %v867 = vadd.f32 %v866, %v757
        %v868 = vrot.slane %v867, 4
        %v869 = vadd.f32 %v867, %v868
        %v870 = vrot.slane %v869, 2
        %v871 = vadd.f32 %v869, %v870
        %v872 = vrot.slane %v871, 1
        %v873 = vadd.f32 %v871, %v872
        %v874 = vadd.f32 %v711, %v727
        %v875 = vadd.f32 %v874, %v743
        %v876 = vadd.f32 %v875, %v759
        %v877 = vrot.slane %v876, 4
        %v878 = vadd.f32 %v876, %v877
        %v879 = vrot.slane %v878, 2
        %v880 = vadd.f32 %v878, %v879
        %v881 = vrot.slane %v880, 1
        %v882 = vadd.f32 %v880, %v881
        %v883 = vadd.f32 %v713, %v729
        %v884 = vadd.f32 %v883, %v745
        %v885 = vadd.f32 %v884, %v761
        %v886 = vrot.slane %v885, 4
        %v887 = vadd.f32 %v885, %v886
        %v888 = vrot.slane %v887, 2
        %v889 = vadd.f32 %v887, %v888
        %v890 = vrot.slane %v889, 1
        %v891 = vadd.f32 %v889, %v890
        %v892 = vadd.f32 %v715, %v731
        %v893 = vadd.f32 %v892, %v747
        %v894 = vadd.f32 %v893, %v763
        %v895 = vrot.slane %v894, 4
        %v896 = vadd.f32 %v894, %v895
        %v897 = vrot.slane %v896, 2
        %v898 = vadd.f32 %v896, %v897
        %v899 = vrot.slane %v898, 1
        %v900 = vadd.f32 %v898, %v899
        %v901 = vadd.f32 %v717, %v733
        %v902 = vadd.f32 %v901, %v749
        %v903 = vadd.f32 %v902, %v765
        %v904 = vrot.slane %v903, 4
        %v905 = vadd.f32 %v903, %v904
        %v906 = vrot.slane %v905, 2
        %v907 = vadd.f32 %v905, %v906
        %v908 = vrot.slane %v907, 1
        %v909 = vadd.f32 %v907, %v908
        %v910 = vmul.f32 %v774, %v846
        %v911 = vmul.f32 %v783, %v855
        %v912 = vmul.f32 %v792, %v864
        %v913 = vmul.f32 %v801, %v873
        %v914 = vmul.f32 %v810, %v882
        %v915 = vmul.f32 %v819, %v891
        %v916 = vmul.f32 %v828, %v900
        %v917 = vmul.f32 %v837, %v909
        %v918 = vrcp.pop %v910
        %v919 = vrcp.pop %v911
        %v920 = vrcp.pop %v912
        %v921 = vrcp.pop %v913
        %v922 = vrcp.pop %v914
        %v923 = vrcp.pop %v915
        %v924 = vrcp.pop %v916
        %v925 = vrcp.pop %v917
        %v926 = vmul.f32 %v575, %v918
        %v927 = vmul.f32 %v577, %v919
        %v928 = vmul.f32 %v579, %v920
        %v929 = vmul.f32 %v581, %v921
        %v930 = vmul.f32 %v583, %v922
        %v931 = vmul.f32 %v585, %v923
        %v932 = vmul.f32 %v587, %v924
        %v933 = vmul.f32 %v589, %v925
        %v934 = vmul.f32 %v591, %v918
        %v935 = vmul.f32 %v593, %v919
        %v936 = vmul.f32 %v595, %v920
        %v937 = vmul.f32 %v597, %v921
        %v938 = vmul.f32 %v599, %v922
        %v939 = vmul.f32 %v601, %v923
        %v940 = vmul.f32 %v603, %v924
        %v941 = vmul.f32 %v605, %v925
        %v942 = vmul.f32 %v607, %v918
        %v943 = vmul.f32 %v609, %v919
        %v944 = vmul.f32 %v611, %v920
        %v945 = vmul.f32 %v613, %v921
        %v946 = vmul.f32 %v615, %v922
        %v947 = vmul.f32 %v617, %v923
        %v948 = vmul.f32 %v619, %v924
        %v949 = vmul.f32 %v621, %v925
        %v950 = vmul.f32 %v623, %v918
        %v951 = vmul.f32 %v625, %v919
        %v952 = vmul.f32 %v627, %v920
        %v953 = vmul.f32 %v629, %v921
        %v954 = vmul.f32 %v631, %v922
        %v955 = vmul.f32 %v633, %v923
        %v956 = vmul.f32 %v635, %v924
        %v957 = vmul.f32 %v637, %v925
        %v958 = vld [vmem:[%s228] sm:$0xff]
        %v959 = vld [vmem:[%s228 + $0x8] sm:$0xff]
        %v960 = vld [vmem:[%s228 + $0x10] sm:$0xff]
        %v961 = vld [vmem:[%s228 + $0x18] sm:$0xff]
        %v962 = vpack.c.bf16 %v934, %v926
        %v963 = vpack.c.bf16 %v935, %v927
        %v964 = vpack.c.bf16 %v936, %v928
        %v965 = vpack.c.bf16 %v937, %v929
        %v966 = vpack.c.bf16 %v938, %v930
        %v967 = vpack.c.bf16 %v939, %v931
        %v968 = vpack.c.bf16 %v940, %v932
        %v969 = vpack.c.bf16 %v941, %v933
        %v970 = vpack.c.bf16 %v950, %v942
        %v971 = vpack.c.bf16 %v951, %v943
        %v972 = vpack.c.bf16 %v952, %v944
        %v973 = vpack.c.bf16 %v953, %v945
        %v974 = vpack.c.bf16 %v954, %v946
        %v975 = vpack.c.bf16 %v955, %v947
        %v976 = vpack.c.bf16 %v956, %v948
        %v977 = vpack.c.bf16 %v957, %v949
        %v978 = vpack.c.bf16 %v719, %v703
        %v979 = vpack.c.bf16 %v721, %v705
        %v980 = vpack.c.bf16 %v723, %v707
        %v981 = vpack.c.bf16 %v725, %v709
        %v982 = vpack.c.bf16 %v727, %v711
        %v983 = vpack.c.bf16 %v729, %v713
        %v984 = vpack.c.bf16 %v731, %v715
        %v985 = vpack.c.bf16 %v733, %v717
        %v986 = vpack.c.bf16 %v751, %v735
        %v987 = vpack.c.bf16 %v753, %v737
        %v988 = vpack.c.bf16 %v755, %v739
        %v989 = vpack.c.bf16 %v757, %v741
        %v990 = vpack.c.bf16 %v759, %v743
        %v991 = vpack.c.bf16 %v761, %v745
        %v992 = vpack.c.bf16 %v763, %v747
        %v993 = vpack.c.bf16 %v765, %v749
        %994 = vmatprep.subr.bf16.mxu0 %v979
        %995 = vmatpush1.bf16.xpose.msra.mxu0 %v978
        %996 = vmatprep.subr.bf16.mxu0 %v987
        %997 = vmatpush1.bf16.xpose.msra.mxu0 %v986
        %998 = vmatprep.subr.bf16.mxu0 0
        %999 = vmatpush1.bf16.xpose.msra.mxu0 0
        %1000 = vmatprep.subr.bf16.mxu0 0
        %1001 = vmatpush1.bf16.xpose.msra.mxu0 0
        %1002 = vmatprep.subr.bf16.mxu0 0
        %1003 = vmatpush1.bf16.xpose.msra.mxu0 0
        %1004 = vmatprep.subr.bf16.mxu0 0
        %1005 = vmatpush1.bf16.xpose.msra.mxu0 0
        %1006 = vmatprep.subr.bf16.mxu0 0
        %1007 = vmatpush1.bf16.xpose.msra.mxu0 0
        %1008 = vmatprep.subr.bf16.mxu0 0
        %1009 = vmatpush1.bf16.xpose.msra.mxu0 0
        %1010 = vmatprep.subr.bf16.mxu0 0
        %1011 = vmatpush1.bf16.xpose.msra.mxu0 0
        %1012 = vmatprep.subr.bf16.mxu0 0
        %1013 = vmatpush1.bf16.xpose.msra.mxu0 0
        %1014 = vmatprep.subr.bf16.mxu0 0
        %1015 = vmatpush1.bf16.xpose.msra.mxu0 0
        %1016 = vmatprep.subr.bf16.mxu0 0
        %1017 = vmatpush1.bf16.xpose.msra.mxu0 0
        %1018 = vmatprep.subr.bf16.mxu0 0
        %1019 = vmatpush1.bf16.xpose.msra.mxu0 0
        %1020 = vmatprep.subr.bf16.mxu0 0
        %1021 = vmatpush1.bf16.xpose.msra.mxu0 0
        %1022 = vmatprep.subr.bf16.mxu0 0
        %1023 = vmatpush1.bf16.xpose.msra.mxu0 0
        %1024 = vmatprep.subr.bf16.mxu0 0
        %1025 = vmatpush1.bf16.xpose.msra.mxu0 0
        %1026 = vmatprep.mubr.bf16.mxu0 %v963
        %1027 = vmatmul.mubr.bf16.gmra.mrb[0].mxu0 %v962
        %v1028 = vpop.f32.mrb[0].mxu0
        %v1029 = vadd.f32 0.0, %v1028
        %v1030 = vpop.f32.mrb[0].mxu0
        %v1031 = vpop.f32.mrb[0].mxu0
        %v1032 = vadd.f32 0.0, %v1031
        %v1033 = vpop.f32.mrb[0].mxu0
        %1034 = vmatprep.mubr.bf16.mxu0 %v971
        %1035 = vmatmul.mubr.bf16.gmra.mrb[0].mxu0 %v970
        %v1036 = vpop.f32.mrb[0].mxu0
        %v1037 = vadd.f32 0.0, %v1036
        %v1038 = vpop.f32.mrb[0].mxu0
        %v1039 = vpop.f32.mrb[0].mxu0
        %v1040 = vadd.f32 0.0, %v1039
        %v1041 = vpop.f32.mrb[0].mxu0
        %1042 = vdwg.mxu0
        %1043 = vmatprep.subr.bf16.mxu0 %v981
        %1044 = vmatpush1.bf16.xpose.msra.mxu0 %v980
        %1045 = vmatprep.subr.bf16.mxu0 %v989
        %1046 = vmatpush1.bf16.xpose.msra.mxu0 %v988
        %1047 = vmatprep.subr.bf16.mxu0 0
        %1048 = vmatpush1.bf16.xpose.msra.mxu0 0
        %1049 = vmatprep.subr.bf16.mxu0 0
        %1050 = vmatpush1.bf16.xpose.msra.mxu0 0
        %1051 = vmatprep.subr.bf16.mxu0 0
        %1052 = vmatpush1.bf16.xpose.msra.mxu0 0
        %1053 = vmatprep.subr.bf16.mxu0 0
        %1054 = vmatpush1.bf16.xpose.msra.mxu0 0
        %1055 = vmatprep.subr.bf16.mxu0 0
        %1056 = vmatpush1.bf16.xpose.msra.mxu0 0
        %1057 = vmatprep.subr.bf16.mxu0 0
        %1058 = vmatpush1.bf16.xpose.msra.mxu0 0
        %1059 = vmatprep.subr.bf16.mxu0 0
        %1060 = vmatpush1.bf16.xpose.msra.mxu0 0
        %1061 = vmatprep.subr.bf16.mxu0 0
        %1062 = vmatpush1.bf16.xpose.msra.mxu0 0
        %1063 = vmatprep.subr.bf16.mxu0 0
        %1064 = vmatpush1.bf16.xpose.msra.mxu0 0
        %1065 = vmatprep.subr.bf16.mxu0 0
        %1066 = vmatpush1.bf16.xpose.msra.mxu0 0
        %1067 = vmatprep.subr.bf16.mxu0 0
        %1068 = vmatpush1.bf16.xpose.msra.mxu0 0
        %1069 = vmatprep.subr.bf16.mxu0 0
        %1070 = vmatpush1.bf16.xpose.msra.mxu0 0
        %1071 = vmatprep.subr.bf16.mxu0 0
        %1072 = vmatpush1.bf16.xpose.msra.mxu0 0
        %1073 = vmatprep.subr.bf16.mxu0 0
        %1074 = vmatpush1.bf16.xpose.msra.mxu0 0
        %1075 = vmatprep.mubr.bf16.mxu0 %v965
        %1076 = vmatmul.mubr.bf16.gmra.mrb[0].mxu0 %v964
        %v1077 = vpop.f32.mrb[0].mxu0
        %v1078 = vadd.f32 %v1029, %v1077
        %v1079 = vpop.f32.mrb[0].mxu0
        %v1080 = vpop.f32.mrb[0].mxu0
        %v1081 = vadd.f32 %v1032, %v1080
        %v1082 = vpop.f32.mrb[0].mxu0
        %1083 = vmatprep.mubr.bf16.mxu0 %v973
        %1084 = vmatmul.mubr.bf16.gmra.mrb[0].mxu0 %v972
        %v1085 = vpop.f32.mrb[0].mxu0
        %v1086 = vadd.f32 %v1037, %v1085
        %v1087 = vpop.f32.mrb[0].mxu0
        %v1088 = vpop.f32.mrb[0].mxu0
        %v1089 = vadd.f32 %v1040, %v1088
        %v1090 = vpop.f32.mrb[0].mxu0
        %1091 = vdwg.mxu0
        %1092 = vmatprep.subr.bf16.mxu0 %v983
        %1093 = vmatpush1.bf16.xpose.msra.mxu0 %v982
        %1094 = vmatprep.subr.bf16.mxu0 %v991
        %1095 = vmatpush1.bf16.xpose.msra.mxu0 %v990
        %1096 = vmatprep.subr.bf16.mxu0 0
        %1097 = vmatpush1.bf16.xpose.msra.mxu0 0
        %1098 = vmatprep.subr.bf16.mxu0 0
        %1099 = vmatpush1.bf16.xpose.msra.mxu0 0
        %1100 = vmatprep.subr.bf16.mxu0 0
        %1101 = vmatpush1.bf16.xpose.msra.mxu0 0
        %1102 = vmatprep.subr.bf16.mxu0 0
        %1103 = vmatpush1.bf16.xpose.msra.mxu0 0
        %1104 = vmatprep.subr.bf16.mxu0 0
        %1105 = vmatpush1.bf16.xpose.msra.mxu0 0
        %1106 = vmatprep.subr.bf16.mxu0 0
        %1107 = vmatpush1.bf16.xpose.msra.mxu0 0
        %1108 = vmatprep.subr.bf16.mxu0 0
        %1109 = vmatpush1.bf16.xpose.msra.mxu0 0
        %1110 = vmatprep.subr.bf16.mxu0 0
        %1111 = vmatpush1.bf16.xpose.msra.mxu0 0
        %1112 = vmatprep.subr.bf16.mxu0 0
        %1113 = vmatpush1.bf16.xpose.msra.mxu0 0
        %1114 = vmatprep.subr.bf16.mxu0 0
        %1115 = vmatpush1.bf16.xpose.msra.mxu0 0
        %1116 = vmatprep.subr.bf16.mxu0 0
        %1117 = vmatpush1.bf16.xpose.msra.mxu0 0
        %1118 = vmatprep.subr.bf16.mxu0 0
        %1119 = vmatpush1.bf16.xpose.msra.mxu0 0
        %1120 = vmatprep.subr.bf16.mxu0 0
        %1121 = vmatpush1.bf16.xpose.msra.mxu0 0
        %1122 = vmatprep.subr.bf16.mxu0 0
        %1123 = vmatpush1.bf16.xpose.msra.mxu0 0
        %1124 = vmatprep.mubr.bf16.mxu0 %v967
        %1125 = vmatmul.mubr.bf16.gmra.mrb[0].mxu0 %v966
        %v1126 = vpop.f32.mrb[0].mxu0
        %v1127 = vadd.f32 %v1078, %v1126
        %v1128 = vpop.f32.mrb[0].mxu0
        %v1129 = vpop.f32.mrb[0].mxu0
        %v1130 = vadd.f32 %v1081, %v1129
        %v1131 = vpop.f32.mrb[0].mxu0
        %1132 = vmatprep.mubr.bf16.mxu0 %v975
        %1133 = vmatmul.mubr.bf16.gmra.mrb[0].mxu0 %v974
        %v1134 = vpop.f32.mrb[0].mxu0
        %v1135 = vadd.f32 %v1086, %v1134
        %v1136 = vpop.f32.mrb[0].mxu0
        %v1137 = vpop.f32.mrb[0].mxu0
        %v1138 = vadd.f32 %v1089, %v1137
        %v1139 = vpop.f32.mrb[0].mxu0
        %1140 = vdwg.mxu0
        %1141 = vmatprep.subr.bf16.mxu0 %v985
        %1142 = vmatpush1.bf16.xpose.msra.mxu0 %v984
        %1143 = vmatprep.subr.bf16.mxu0 %v993
        %1144 = vmatpush1.bf16.xpose.msra.mxu0 %v992
        %1145 = vmatprep.subr.bf16.mxu0 0
        %1146 = vmatpush1.bf16.xpose.msra.mxu0 0
        %1147 = vmatprep.subr.bf16.mxu0 0
        %1148 = vmatpush1.bf16.xpose.msra.mxu0 0
        %1149 = vmatprep.subr.bf16.mxu0 0
        %1150 = vmatpush1.bf16.xpose.msra.mxu0 0
        %1151 = vmatprep.subr.bf16.mxu0 0
        %1152 = vmatpush1.bf16.xpose.msra.mxu0 0
        %1153 = vmatprep.subr.bf16.mxu0 0
        %1154 = vmatpush1.bf16.xpose.msra.mxu0 0
        %1155 = vmatprep.subr.bf16.mxu0 0
        %1156 = vmatpush1.bf16.xpose.msra.mxu0 0
        %1157 = vmatprep.subr.bf16.mxu0 0
        %1158 = vmatpush1.bf16.xpose.msra.mxu0 0
        %1159 = vmatprep.subr.bf16.mxu0 0
        %1160 = vmatpush1.bf16.xpose.msra.mxu0 0
        %1161 = vmatprep.subr.bf16.mxu0 0
        %1162 = vmatpush1.bf16.xpose.msra.mxu0 0
        %1163 = vmatprep.subr.bf16.mxu0 0
        %1164 = vmatpush1.bf16.xpose.msra.mxu0 0
        %1165 = vmatprep.subr.bf16.mxu0 0
        %1166 = vmatpush1.bf16.xpose.msra.mxu0 0
        %1167 = vmatprep.subr.bf16.mxu0 0
        %1168 = vmatpush1.bf16.xpose.msra.mxu0 0
        %1169 = vmatprep.subr.bf16.mxu0 0
        %1170 = vmatpush1.bf16.xpose.msra.mxu0 0
        %1171 = vmatprep.subr.bf16.mxu0 0
        %1172 = vmatpush1.bf16.xpose.msra.mxu0 0
        %1173 = vmatprep.mubr.bf16.mxu0 %v969
        %1174 = vmatmul.mubr.bf16.gmra.mrb[0].mxu0 %v968
        %v1175 = vpop.f32.mrb[0].mxu0
        %v1176 = vadd.f32 %v1127, %v1175
        %v1177 = vpop.f32.mrb[0].mxu0
        %v1178 = vpop.f32.mrb[0].mxu0
        %v1179 = vadd.f32 %v1130, %v1178
        %v1180 = vpop.f32.mrb[0].mxu0
        %1181 = vmatprep.mubr.bf16.mxu0 %v977
        %1182 = vmatmul.mubr.bf16.gmra.mrb[0].mxu0 %v976
        %v1183 = vpop.f32.mrb[0].mxu0
        %v1184 = vadd.f32 %v1135, %v1183
        %v1185 = vpop.f32.mrb[0].mxu0
        %v1186 = vpop.f32.mrb[0].mxu0
        %v1187 = vadd.f32 %v1138, %v1186
        %v1188 = vpop.f32.mrb[0].mxu0
        %1189 = vdwg.mxu0
        %v1190 = vadd.f32 %v958, %v1176
        %v1191 = vadd.f32 %v959, %v1179
        %v1192 = vadd.f32 %v960, %v1184
        %v1193 = vadd.f32 %v961, %v1187
        %vm1194 = vcmask 261120
        %1195 = vst.msk [vmem:[%s228] sm:$0xff] %vm1194, %v1190
        %1196 = vst.msk [vmem:[%s228 + $0x8] sm:$0xff] %vm1194, %v1191
        %1197 = vst.msk [vmem:[%s228 + $0x10] sm:$0xff] %vm1194, %v1192
        %1198 = vst.msk [vmem:[%s228 + $0x18] sm:$0xff] %vm1194, %v1193
        %s1199 = sand.u32 %s111, 1
        %s1200 = scalar_lea.sflag [#allocation4], %s1199
        %s1201 = sand.u32 %s111, 1
        %s1202 = smul.addr %s1201, 32
        %s1203 = scalar_lea.vmem [#allocation7], %s1202
        // Predicated region
        $region41: #{tpu_custom_call.1} parent=27 // pred_check
          %p1204 = pneg %p121
        $region42: #{tpu_custom_call.1} parent=27 // pred_check_branch
          %1206 = sbr.rel (%p1204) target = $region44
        $region43: #{tpu_custom_call.1} parent=27 // pred_region
          %s1208 = ssub.s32 512, 512
          %1209 = vsyncadd %s1200, %s1208
          %s1210 = smul.addr %s28, 4
          %s1211 = smul.addr %s27, 4
          %s1212 = sadd.s32 %s1210, %s1211
          %s1213 = smul.addr %s1212, 128
          %s1214 = scalar_lea.hbm %s2, %s1213
          %s1215 = sshll.u32 %s1203, 4
          %s1216 = int_to_ptr.vmem [resolvable:$true] %s1215
          %1221 = dma.vmem_to_hbm [thread:$0]  %s1216, 512, %s1214, %s1200, 128, 128, 8
        $region44: #{tpu_custom_call.1} parent=27 // pred_fallthru
          _
      $region28: #{tpu_custom_call.1} parent=5 // pred_fallthru
        _
      %p1222 = scmp.le.s32.totalorder 2, %s17
      // Predicated region
      $region45: #{tpu_custom_call.1} parent=5 // pred_check
        %p1223 = pneg %p1222
      $region46: #{tpu_custom_call.1} parent=5 // pred_check_branch
        %1225 = sbr.rel (%p1223) target = $region48
      $region47: #{tpu_custom_call.1} parent=5 // pred_region
        %s1226 = ssub.s32 %s17, 2
        // Predicated region
        $region49: #{tpu_custom_call.1} parent=47 // pred_check
          %p1227 = pneg %p127
        $region50: #{tpu_custom_call.1} parent=47 // pred_check_branch
          %1229 = sbr.rel (%p1227) target = $region52
        $region51: #{tpu_custom_call.1} parent=47 // pred_region
          %s1230 = sand.u32 %s112, 1
          %s1231 = scalar_lea.sflag [#allocation4], %s1230
          %s1232 = sand.u32 %s112, 1
          %s1233 = smul.addr %s1232, 32
          %s1234 = scalar_lea.vmem [#allocation7], %s1233
          %1235 = dma.done %s1231, 512
        $region52: #{tpu_custom_call.1} parent=47 // pred_fallthru
          _
      $region48: #{tpu_custom_call.1} parent=5 // pred_fallthru
        _
    $region6: #{tpu_custom_call.1} parent=1 // loop_footer
      %s21 = sadd.s32 1, %s17
    $region7: #{tpu_custom_call.1} parent=1 // loop_footer_branch
      %16 = sbr.rel target = $region3
    $region8: #{tpu_custom_call.1} parent=1 // loop_exit
      _
    %1236 = vsyncpa [#allocation3], 1
    %s1237 = scalar_lea.sflag [#allocation3], 1
    %1238 = vsyncpa %s1237, 1
    %1239 = vsyncpa [#allocation6], 1
    %s1240 = scalar_lea.sflag [#allocation6], 1
    %1241 = vsyncpa %s1240, 1
    %1242 = vsyncpa [#allocation4], 1
    %s1243 = scalar_lea.sflag [#allocation4], 1
    %1244 = vsyncpa %s1243, 1

</llo_original>
